<compile_context>
chip_gen: v7x
topology: tpu7x:2x2x1
jax: 0.10.0
libtpu: 0.0.40
codegen_flags: <defaults>
</compile_context>

<pallas_src>
import functools

import jax
import jax.numpy as jnp
from jax.experimental import pallas as pl
from jax.experimental.pallas import tpu as pltpu


def encoder_kernel(x_ref, w1_ref, b1_ref, wmv_ref, bmv_ref, eps_ref, out_ref):
    latent = wmv_ref.shape[1] // 2

    # h = relu(x @ W1 + b1)   (bf16 MXU operands, f32 accumulation + epilogue)
    h = jnp.dot(x_ref[...], w1_ref[...], preferred_element_type=jnp.float32)
    h = jnp.maximum(h + b1_ref[...], 0.0)

    # Fused projection: mv = [mean | log_var] = h @ [Wm | Wv] + [bm | bv]
    mv = jnp.dot(h.astype(wmv_ref.dtype), wmv_ref[...],
                 preferred_element_type=jnp.float32) + bmv_ref[...]
    mean = mv[:, :latent]
    log_var = mv[:, latent:]

    # std = exp(0.5 * log_var); z = mean + std * eps  (eps ~ Uniform[0,1),
    # matching torch.rand_like in the reference module)
    z = mean + jnp.exp(0.5 * log_var) * eps_ref[...]

    # Output slab ordered [mean | log_var | z]: mv passes through unchanged
    # (contiguous lanes); only z needs assembly.
    out_ref[...] = jnp.concatenate([mv, z], axis=-1)


def prepare_encoder_params(w1, b1, wm, bm, wv, bv, *, mat_dtype=jnp.bfloat16):
    """One-time weight fusion + dtype casts (kept out of the per-call hot path)."""
    wmv = jnp.concatenate([wm, wv], axis=1)                    # [hidden, 2*latent]
    bmv = jnp.concatenate([bm, bv]).reshape(1, -1)             # [1, 2*latent]
    return {
        "w1": w1.astype(mat_dtype),                            # [input, hidden]
        "b1": b1.reshape(1, -1).astype(jnp.float32),           # [1, hidden]
        "wmv": wmv.astype(mat_dtype),                          # [hidden, 2*latent]
        "bmv": bmv.astype(jnp.float32),                        # [1, 2*latent]
    }


def _pick_tile_b(batch, max_tile=512):
    """Largest batch tile that evenly divides `batch` (full batch if small)."""
    if batch <= max_tile:
        return batch
    t = max_tile
    while t > 8 and batch % t != 0:
        t //= 2
    return t if batch % t == 0 else batch


@jax.jit
def _encoder_call(x, w1, b1, wmv, bmv, eps):
    B, input_dim = x.shape
    hidden = w1.shape[1]
    latent = wmv.shape[1] // 2

    tile_b = _pick_tile_b(B)
    grid = (B // tile_b,)

    x_m = x.astype(w1.dtype)  # bf16 MXU operand; fuses under jit

    out = pl.pallas_call(
        encoder_kernel,
        out_shape=jax.ShapeDtypeStruct((B, 3 * latent), jnp.float32),
        grid=grid,
        in_specs=[
            pl.BlockSpec((tile_b, input_dim), lambda i: (i, 0)),      # x tile
            pl.BlockSpec((input_dim, hidden), lambda i: (0, 0)),      # W1 (resident)
            pl.BlockSpec((1, hidden), lambda i: (0, 0)),              # b1 (resident)
            pl.BlockSpec((hidden, 2 * latent), lambda i: (0, 0)),     # [Wm|Wv] (resident)
            pl.BlockSpec((1, 2 * latent), lambda i: (0, 0)),          # [bm|bv] (resident)
            pl.BlockSpec((tile_b, latent), lambda i: (i, 0)),         # eps tile
        ],
        out_specs=pl.BlockSpec((tile_b, 3 * latent), lambda i: (i, 0)),
        compiler_params=pltpu.CompilerParams(
            dimension_semantics=("parallel",),       # shards over 2 TCs on v7x
            vmem_limit_bytes=32 * 1024 * 1024,       # safe on v7x's 64 MiB VMEM
        ),
    )(x_m, w1, b1, wmv, bmv, eps)

    mean = out[:, :latent]
    log_var = out[:, latent:2 * latent]
    z = out[:, 2 * latent:]
    return z, mean, log_var


def encoder_forward(x, params, eps):
    return _encoder_call(x, params["w1"], params["b1"],
                         params["wmv"], params["bmv"], eps)


def init_params(key, input_dim, hidden_dim, latent_dim):
    ks = jax.random.split(key, 6)

    # Deterministic synthetic init (PyTorch-Linear-like uniform fan-in scaling).
    def u(k, shape, fan_in):
        bound = 1.0 / jnp.sqrt(fan_in)
        return jax.random.uniform(k, shape, jnp.float32, -bound, bound)

    w1 = u(ks[0], (input_dim, hidden_dim), input_dim)
    b1 = u(ks[1], (hidden_dim,), input_dim)
    wm = u(ks[2], (hidden_dim, latent_dim), hidden_dim)
    bm = u(ks[3], (latent_dim,), hidden_dim)
    wv = u(ks[4], (hidden_dim, latent_dim), hidden_dim)
    bv = u(ks[5], (latent_dim,), hidden_dim)
    return w1, b1, wm, bm, wv, bv


if __name__ == "__main__":
    key = jax.random.PRNGKey(0)
    k_x, k_p, k_eps = jax.random.split(key, 3)

    batch, input_dim, hidden_dim, latent_dim = 8, 64, 32, 16
    x = jax.random.normal(k_x, (batch, input_dim), jnp.float32)
    w1, b1, wm, bm, wv, bv = init_params(k_p, input_dim, hidden_dim, latent_dim)

    # One-time param fusion / casts (out of the hot path).
    params = prepare_encoder_params(w1, b1, wm, bm, wv, bv)

    # epsilon ~ Uniform[0,1), matching torch.rand_like in the reference module.
    eps = jax.random.uniform(k_eps, (batch, latent_dim), jnp.float32)

    z, mean, log_var = encoder_forward(x, params, eps)
    jax.block_until_ready((z, mean, log_var))

    # Pure-JAX reference with the same bf16 matmul-operand casting.
    xm = x.astype(jnp.bfloat16)
    w1m = w1.astype(jnp.bfloat16)
    h_ref = jnp.maximum(
        jnp.dot(xm, w1m, preferred_element_type=jnp.float32) + b1, 0.0)
    hm = h_ref.astype(jnp.bfloat16)
    wmvm = jnp.concatenate([wm, wv], axis=1).astype(jnp.bfloat16)
    mv_ref = (jnp.dot(hm, wmvm, preferred_element_type=jnp.float32)
              + jnp.concatenate([bm, bv]))
    mean_ref = mv_ref[:, :latent_dim]
    logvar_ref = mv_ref[:, latent_dim:]
    z_ref = mean_ref + jnp.exp(0.5 * logvar_ref) * eps

    assert jnp.allclose(mean, mean_ref, atol=5e-3), "mean mismatch"
    assert jnp.allclose(log_var, logvar_ref, atol=5e-3), "log_var mismatch"
    assert jnp.allclose(z, z_ref, atol=5e-3), "z mismatch"

    print("KERNEL_OK")
</pallas_src>

<mosaic_0001>
module attributes {stable_mosaic.version = 11 : i64} {
  func.func @encoder_kernel(%arg0: i32, %arg1: memref<8x64xbf16, #tpu.memory_space<vmem>>, %arg2: memref<64x32xbf16, #tpu.memory_space<vmem>>, %arg3: memref<1x32xf32, #tpu.memory_space<vmem>>, %arg4: memref<32x32xbf16, #tpu.memory_space<vmem>>, %arg5: memref<1x32xf32, #tpu.memory_space<vmem>>, %arg6: memref<8x16xf32, #tpu.memory_space<vmem>>, %arg7: memref<8x48xf32, #tpu.memory_space<vmem>>) attributes {dimension_semantics = [#tpu.dimension_semantics<parallel>], iteration_bounds = array<i64: 1>, scalar_prefetch = 0 : i64, scratch_operands = 0 : i64, tpu.core_type = #tpu.core_type<tc>, window_params = [{transform_indices = @transform_0, window_bounds = array<i64: 8, 64>}, {pipeline_mode = #tpu.pipeline_mode<synchronous>, transform_indices = @transform_1, window_bounds = array<i64: 64, 32>}, {pipeline_mode = #tpu.pipeline_mode<synchronous>, transform_indices = @transform_2, window_bounds = array<i64: 1, 32>}, {pipeline_mode = #tpu.pipeline_mode<synchronous>, transform_indices = @transform_3, window_bounds = array<i64: 32, 32>}, {pipeline_mode = #tpu.pipeline_mode<synchronous>, transform_indices = @transform_4, window_bounds = array<i64: 1, 32>}, {transform_indices = @transform_5, window_bounds = array<i64: 8, 16>}, {transform_indices = @transform_6, window_bounds = array<i64: 8, 48>}]} {
    %c0 = arith.constant 0 : index
    %c0_0 = arith.constant 0 : index
    %0 = vector.load %arg1[%c0, %c0_0] : memref<8x64xbf16, #tpu.memory_space<vmem>>, vector<8x64xbf16>
    %c0_1 = arith.constant 0 : index
    %c0_2 = arith.constant 0 : index
    %1 = vector.load %arg2[%c0_1, %c0_2] : memref<64x32xbf16, #tpu.memory_space<vmem>>, vector<64x32xbf16>
    %cst = arith.constant dense<0.000000e+00> : vector<8x32xf32>
    %2 = tpu.matmul %0, %1, %cst {dimension_numbers = #tpu.dot_dimension_numbers<[1], [0], [0], [1], [0, 0, 1, 1], [], []>} : vector<8x64xbf16>, vector<64x32xbf16>, vector<8x32xf32> -> vector<8x32xf32>
    %c0_3 = arith.constant 0 : index
    %c0_4 = arith.constant 0 : index
    %3 = vector.load %arg3[%c0_3, %c0_4] : memref<1x32xf32, #tpu.memory_space<vmem>>, vector<1x32xf32>
    %4 = vector.broadcast %3 : vector<1x32xf32> to vector<8x32xf32>
    %5 = arith.addf %2, %4 : vector<8x32xf32>
    %cst_5 = arith.constant 0.000000e+00 : f32
    %6 = vector.broadcast %cst_5 : f32 to vector<8x32xf32>
    %7 = arith.maximumf %5, %6 : vector<8x32xf32>
    %8 = arith.truncf %7 : vector<8x32xf32> to vector<8x32xbf16>
    %c0_6 = arith.constant 0 : index
    %c0_7 = arith.constant 0 : index
    %9 = vector.load %arg4[%c0_6, %c0_7] : memref<32x32xbf16, #tpu.memory_space<vmem>>, vector<32x32xbf16>
    %cst_8 = arith.constant dense<0.000000e+00> : vector<8x32xf32>
    %10 = tpu.matmul %8, %9, %cst_8 {dimension_numbers = #tpu.dot_dimension_numbers<[1], [0], [0], [1], [0, 0, 1, 1], [], []>} : vector<8x32xbf16>, vector<32x32xbf16>, vector<8x32xf32> -> vector<8x32xf32>
    %c0_9 = arith.constant 0 : index
    %c0_10 = arith.constant 0 : index
    %11 = vector.load %arg5[%c0_9, %c0_10] : memref<1x32xf32, #tpu.memory_space<vmem>>, vector<1x32xf32>
    %12 = vector.broadcast %11 : vector<1x32xf32> to vector<8x32xf32>
    %13 = arith.addf %10, %12 : vector<8x32xf32>
    %14 = vector.extract_strided_slice %13 {offsets = [0, 0], sizes = [8, 16], strides = [1, 1]} : vector<8x32xf32> to vector<8x16xf32>
    %15 = vector.extract_strided_slice %13 {offsets = [0, 16], sizes = [8, 16], strides = [1, 1]} : vector<8x32xf32> to vector<8x16xf32>
    %cst_11 = arith.constant 5.000000e-01 : f32
    %16 = vector.broadcast %cst_11 : f32 to vector<8x16xf32>
    %17 = arith.mulf %16, %15 : vector<8x16xf32>
    %18 = math.exp %17 : vector<8x16xf32>
    %c0_12 = arith.constant 0 : index
    %c0_13 = arith.constant 0 : index
    %19 = vector.load %arg6[%c0_12, %c0_13] : memref<8x16xf32, #tpu.memory_space<vmem>>, vector<8x16xf32>
    %20 = arith.mulf %18, %19 : vector<8x16xf32>
    %21 = arith.addf %14, %20 : vector<8x16xf32>
    %22 = tpu.concatenate %13, %21 in 1 : vector<8x32xf32>, vector<8x16xf32> -> vector<8x48xf32>
    %c0_14 = arith.constant 0 : index
    %c0_15 = arith.constant 0 : index
    %23 = vector.load %arg7[%c0_14, %c0_15] : memref<8x48xf32, #tpu.memory_space<vmem>>, vector<8x48xf32>
    tpu.vector_store %arg7[%c0_14, %c0_15], %22 {strides = array<i32>} : memref<8x48xf32, #tpu.memory_space<vmem>>, vector<8x48xf32>,
    return
  }
  func.func @transform_0(%arg0: i32) -> (i32, i32) {
    %c0_i32 = arith.constant 0 : i32
    %c0_i32_0 = arith.constant 0 : i32
    return %arg0, %c0_i32 : i32, i32
  }
  func.func @transform_1(%arg0: i32) -> (i32, i32) {
    %c0_i32 = arith.constant 0 : i32
    %c0_i32_0 = arith.constant 0 : i32
    %c0_i32_1 = arith.constant 0 : i32
    return %c0_i32, %c0_i32_0 : i32, i32
  }
  func.func @transform_2(%arg0: i32) -> (i32, i32) {
    %c0_i32 = arith.constant 0 : i32
    %c0_i32_0 = arith.constant 0 : i32
    %c0_i32_1 = arith.constant 0 : i32
    return %c0_i32, %c0_i32_0 : i32, i32
  }
  func.func @transform_3(%arg0: i32) -> (i32, i32) {
    %c0_i32 = arith.constant 0 : i32
    %c0_i32_0 = arith.constant 0 : i32
    %c0_i32_1 = arith.constant 0 : i32
    return %c0_i32, %c0_i32_0 : i32, i32
  }
  func.func @transform_4(%arg0: i32) -> (i32, i32) {
    %c0_i32 = arith.constant 0 : i32
    %c0_i32_0 = arith.constant 0 : i32
    %c0_i32_1 = arith.constant 0 : i32
    return %c0_i32, %c0_i32_0 : i32, i32
  }
  func.func @transform_5(%arg0: i32) -> (i32, i32) {
    %c0_i32 = arith.constant 0 : i32
    %c0_i32_0 = arith.constant 0 : i32
    return %arg0, %c0_i32 : i32, i32
  }
  func.func @transform_6(%arg0: i32) -> (i32, i32) {
    %c0_i32 = arith.constant 0 : i32
    %c0_i32_0 = arith.constant 0 : i32
    return %arg0, %c0_i32 : i32, i32
  }
}

</mosaic_0001>

<llo_original>
// kernel: _encoder_call.1
$region0: #{_encoder_call.1}
  #allocation0 [shape = 'u32[]', space=smem, size = 0x4, offset = 0x4, fixed_abs, tag = 'smem constant byte address 0x4 - core index']
  #allocation1 [shape = 'u32[144,128]{1,0:T(1,128)}', space=vmem, size = 0x12000, scoped, tag = 'internal scratch']
  %s0 = inlined_call_operand.vmem [shape: bf16[8,64], index: 0, kind: input, shape index: {}]
  %s1 = inlined_call_operand.vmem [shape: bf16[64,32], index: 1, kind: input, shape index: {}]
  %s2 = inlined_call_operand.vmem [shape: f32[1,32], index: 2, kind: input, shape index: {}]
  %s3 = inlined_call_operand.vmem [shape: bf16[32,32], index: 3, kind: input, shape index: {}]
  %s4 = inlined_call_operand.vmem [shape: f32[1,32], index: 4, kind: input, shape index: {}]
  %s5 = inlined_call_operand.vmem [shape: f32[8,16], index: 5, kind: input, shape index: {}]
  %s6 = inlined_call_operand.vmem [shape: f32[8,48], index: 6, kind: output, shape index: {}]
  %s7 = sld [smem:[#allocation0]]
  $region34: #{_encoder_call.1} parent=0
    _
  %s9 = ssub.s32 1, %s7
  %s10 = scalar_select 0, %s9, %s7
  // Predicated region
  $region2: #{_encoder_call.1} parent=0 // pred_check
    _
  $region3: #{_encoder_call.1} parent=0 // pred_check_branch
    %12 = sbr.rel (0) target = $region5
  $region4: #{_encoder_call.1} parent=0 // pred_region
    _
  $region5: #{_encoder_call.1} parent=0 // pred_fallthru
    _
  // Predicated region
  $region6: #{_encoder_call.1} parent=0 // pred_check
    _
  $region7: #{_encoder_call.1} parent=0 // pred_check_branch
    %14 = sbr.rel (0) target = $region9
  $region8: #{_encoder_call.1} parent=0 // pred_region
    _
  $region9: #{_encoder_call.1} parent=0 // pred_fallthru
    _
  // Predicated region
  $region10: #{_encoder_call.1} parent=0 // pred_check
    _
  $region11: #{_encoder_call.1} parent=0 // pred_check_branch
    %16 = sbr.rel (0) target = $region13
  $region12: #{_encoder_call.1} parent=0 // pred_region
    _
  $region13: #{_encoder_call.1} parent=0 // pred_fallthru
    _
  // Predicated region
  $region14: #{_encoder_call.1} parent=0 // pred_check
    _
  $region15: #{_encoder_call.1} parent=0 // pred_check_branch
    %18 = sbr.rel (0) target = $region17
  $region16: #{_encoder_call.1} parent=0 // pred_region
    _
  $region17: #{_encoder_call.1} parent=0 // pred_fallthru
    _
  // Predicated region
  $region18: #{_encoder_call.1} parent=0 // pred_check
    _
  $region19: #{_encoder_call.1} parent=0 // pred_check_branch
    %20 = sbr.rel (0) target = $region21
  $region20: #{_encoder_call.1} parent=0 // pred_region
    _
  $region21: #{_encoder_call.1} parent=0 // pred_fallthru
    _
  // Predicated region
  $region22: #{_encoder_call.1} parent=0 // pred_check
    _
  $region23: #{_encoder_call.1} parent=0 // pred_check_branch
    %22 = sbr.rel (0) target = $region25
  $region24: #{_encoder_call.1} parent=0 // pred_region
    _
  $region25: #{_encoder_call.1} parent=0 // pred_fallthru
    _
  %v24 = vld [vmem:[%s0] sm:$0xf]
  %v25 = vld [vmem:[%s1] sm:$0xf]
  %v26 = vld [vmem:[%s1 + $0x4] sm:$0xf]
  %v27 = vld [vmem:[%s1 + $0x8] sm:$0xf]
  %v28 = vld [vmem:[%s1 + $0xc] sm:$0xf]
  %v29 = vld [vmem:[%s1 + $0x10] sm:$0xf]
  %v30 = vld [vmem:[%s1 + $0x14] sm:$0xf]
  %v31 = vld [vmem:[%s1 + $0x18] sm:$0xf]
  %v32 = vld [vmem:[%s1 + $0x1c] sm:$0xf]
  %v33 = vld [vmem:[%s2] sm:$0x1]
  %v35 = vlaneseq
  %v36 = vshrl.u32 %v35, 7
  %v37 = vsub.s32 0, %v36
  %v38 = vrot.slane %v33, %v37
  %v48 = vunpack.c.l.b16 %v25
  %v49 = vunpack.c.l.b16 %v26
  %v50 = vunpack.c.l.b16 %v27
  %v51 = vunpack.c.l.b16 %v28
  %v52 = vunpack.c.l.b16 %v29
  %v53 = vunpack.c.l.b16 %v30
  %v54 = vunpack.c.l.b16 %v31
  %v55 = vunpack.c.l.b16 %v32
  %v56 = vpack.c.b16 %v49, %v48
  %v57 = vpack.c.b16 %v51, %v50
  %v58 = vpack.c.b16 %v53, %v52
  %v59 = vpack.c.b16 %v55, %v54
  %vm64 = vcmask 523264
  %v66 = vsel %vm64, %v24, 0
  %68 = vmatprep.subr.bf16.mxu0 0
  %69 = vmatpush1.bf16.msra.mxu0 %v56
  %70 = vmatprep.subr.bf16.mxu0 0
  %71 = vmatpush1.bf16.msra.mxu0 %v57
  %72 = vmatprep.subr.bf16.mxu0 0
  %73 = vmatpush1.bf16.msra.mxu0 %v58
  %74 = vmatprep.subr.bf16.mxu0 0
  %75 = vmatpush1.bf16.msra.mxu0 %v59
  %76 = vmatprep.subr.bf16.mxu0 0
  %77 = vmatpush1.bf16.msra.mxu0 0
  %78 = vmatprep.subr.bf16.mxu0 0
  %79 = vmatpush1.bf16.msra.mxu0 0
  %80 = vmatprep.subr.bf16.mxu0 0
  %81 = vmatpush1.bf16.msra.mxu0 0
  %82 = vmatprep.subr.bf16.mxu0 0
  %83 = vmatpush1.bf16.msra.mxu0 0
  %84 = vmatprep.subr.bf16.mxu0 0
  %85 = vmatpush1.bf16.msra.mxu0 0
  %86 = vmatprep.subr.bf16.mxu0 0
  %87 = vmatpush1.bf16.msra.mxu0 0
  %88 = vmatprep.subr.bf16.mxu0 0
  %89 = vmatpush1.bf16.msra.mxu0 0
  %90 = vmatprep.subr.bf16.mxu0 0
  %91 = vmatpush1.bf16.msra.mxu0 0
  %92 = vmatprep.subr.bf16.mxu0 0
  %93 = vmatpush1.bf16.msra.mxu0 0
  %94 = vmatprep.subr.bf16.mxu0 0
  %95 = vmatpush1.bf16.msra.mxu0 0
  %96 = vmatprep.subr.bf16.mxu0 0
  %97 = vmatpush1.bf16.msra.mxu0 0
  %98 = vmatprep.subr.bf16.mxu0 0
  %99 = vmatpush1.bf16.msra.mxu0 0
  %100 = vmatprep.mubr.bf16.mxu0 0
  %101 = vmatmul.mubr.bf16.gmra.mrb[0].mxu0 %v66
  %v102 = vpop.f32.mrb[0].mxu0
  %v103 = vadd.f32 %v38, %v102
  %v104 = vpop.f32.mrb[0].mxu0
  %v105 = vpop.f32.mrb[0].mxu0
  %v106 = vpop.f32.mrb[0].mxu0
  %107 = vdwg.mxu0
  %v108 = vmax.f32 %v103, 0.0
  %v109 = vpack.c.bf16 %v108, %v108
  %v110 = vld [vmem:[%s3] sm:$0xf]
  %v111 = vld [vmem:[%s3 + $0x4] sm:$0xf]
  %v112 = vld [vmem:[%s3 + $0x8] sm:$0xf]
  %v113 = vld [vmem:[%s3 + $0xc] sm:$0xf]
  %v114 = vld [vmem:[%s4] sm:$0x1]
  %v116 = vlaneseq
  %v117 = vshrl.u32 %v116, 7
  %v118 = vsub.s32 0, %v117
  %v119 = vrot.slane %v114, %v118
  %v125 = vunpack.c.l.b16 %v110
  %v126 = vunpack.c.l.b16 %v111
  %v127 = vunpack.c.l.b16 %v112
  %v128 = vunpack.c.l.b16 %v113
  %v129 = vpack.c.b16 %v126, %v125
  %v130 = vpack.c.b16 %v128, %v127
  %vm133 = vcmask 261120
  %v135 = vsel %vm133, %v109, 0
  %137 = vmatprep.subr.bf16.mxu0 0
  %138 = vmatpush1.bf16.msra.mxu0 %v129
  %139 = vmatprep.subr.bf16.mxu0 0
  %140 = vmatpush1.bf16.msra.mxu0 %v130
  %141 = vmatprep.subr.bf16.mxu0 0
  %142 = vmatpush1.bf16.msra.mxu0 0
  %143 = vmatprep.subr.bf16.mxu0 0
  %144 = vmatpush1.bf16.msra.mxu0 0
  %145 = vmatprep.subr.bf16.mxu0 0
  %146 = vmatpush1.bf16.msra.mxu0 0
  %147 = vmatprep.subr.bf16.mxu0 0
  %148 = vmatpush1.bf16.msra.mxu0 0
  %149 = vmatprep.subr.bf16.mxu0 0
  %150 = vmatpush1.bf16.msra.mxu0 0
  %151 = vmatprep.subr.bf16.mxu0 0
  %152 = vmatpush1.bf16.msra.mxu0 0
  %153 = vmatprep.subr.bf16.mxu0 0
  %154 = vmatpush1.bf16.msra.mxu0 0
  %155 = vmatprep.subr.bf16.mxu0 0
  %156 = vmatpush1.bf16.msra.mxu0 0
  %157 = vmatprep.subr.bf16.mxu0 0
  %158 = vmatpush1.bf16.msra.mxu0 0
  %159 = vmatprep.subr.bf16.mxu0 0
  %160 = vmatpush1.bf16.msra.mxu0 0
  %161 = vmatprep.subr.bf16.mxu0 0
  %162 = vmatpush1.bf16.msra.mxu0 0
  %163 = vmatprep.subr.bf16.mxu0 0
  %164 = vmatpush1.bf16.msra.mxu0 0
  %165 = vmatprep.subr.bf16.mxu0 0
  %166 = vmatpush1.bf16.msra.mxu0 0
  %167 = vmatprep.subr.bf16.mxu0 0
  %168 = vmatpush1.bf16.msra.mxu0 0
  %169 = vmatprep.mubr.bf16.mxu0 0
  %170 = vmatmul.mubr.bf16.gmra.mrb[0].mxu0 %v135
  %v171 = vpop.f32.mrb[0].mxu0
  %v172 = vadd.f32 %v119, %v171
  %v173 = vpop.f32.mrb[0].mxu0
  %v174 = vpop.f32.mrb[0].mxu0
  %v175 = vpop.f32.mrb[0].mxu0
  %176 = vdwg.mxu0
  %v177 = vmul.f32 %v172, 0.5
  %v178 = vmul.f32 %v177, 1.442695
  %v179 = vpow.pop %v178
  %v180 = vld [vmem:[%s5] sm:$0xff]
  %182 = vrot.lane.b32.xlu0 %v180, 16
  %v183 = vpop.permute.xlu0 %182
  %v185 = vmul.f32 %v179, %v183
  %187 = vrot.lane.b32.xlu0 %v185, 112
  %v188 = vpop.permute.xlu0 %187
  %v190 = vadd.f32 %v172, %v188
  %192 = vrot.lane.b32.xlu0 %v190, 32
  %v193 = vpop.permute.xlu0 %192
  %v195 = vsel %vm133, %v172, %v193
  %vm196 = vcmask 392192
  %197 = vst.msk [vmem:[%s6] sm:$0xff] %vm196, %v195
  // Predicated region
  $region26: #{_encoder_call.1} parent=0 // pred_check
    _
  $region27: #{_encoder_call.1} parent=0 // pred_check_branch
    %199 = sbr.rel (0) target = $region29
  $region28: #{_encoder_call.1} parent=0 // pred_region
    _
  $region29: #{_encoder_call.1} parent=0 // pred_fallthru
    _
  // Predicated region
  $region30: #{_encoder_call.1} parent=0 // pred_check
    _
  $region31: #{_encoder_call.1} parent=0 // pred_check_branch
    %201 = sbr.rel (0) target = $region33
  $region32: #{_encoder_call.1} parent=0 // pred_region
    _
  $region33: #{_encoder_call.1} parent=0 // pred_fallthru
    _

</llo_original>
